<compile_context>
chip_gen: v5e
topology: v5e:2x2
jax: 0.10.0
libtpu: 0.0.40
codegen_flags: <defaults>
</compile_context>

<pallas_src>
import functools

import jax
import jax.numpy as jnp
from jax.experimental import pallas as pl
from jax.experimental.pallas import tpu as pltpu


def _round_up(x, m):
    return (x + m - 1) // m * m


def _vmem_budget_and_limit():
    """Per-generation scoped-VMEM limit and the planning budget for tiles."""
    try:
        phys = int(pltpu.get_tpu_info().vmem_capacity_bytes)
    except Exception:  # not a TPU / attribute mismatch -> conservative (v7x-sized)
        phys = 64 << 20
    limit = max(32 << 20, min((phys * 3) // 4, 100 << 20))
    budget = (limit * 2) // 3          # headroom for compiler-internal scratch
    return budget, limit


def _choose_tile_rows(n_rows, feat, max_tile_rows, vmem_budget_bytes, maha):
    """Largest batch tile that fits the VMEM budget (biggest tile == fewest steps)."""
    f_pad = _round_up(feat, 128)                       # lane padding of the feature axis
    fixed = 0
    if maha:
        # cov_inv block is resident but still double-buffered by the pipeline.
        # TODO(synk): pin single-buffered (pl.Buffered(1)) / one-shot DMA for large F.
        fixed = 2 * _round_up(feat, 8) * f_pad * 4
    # Per-row VMEM: 3 double-buffered input blocks + ~4 f32 temps (Maha d/t) +
    # 2 double-buffered (TN, 1) output blocks, each lane-padded to 128.
    per_row = (6 + 4) * f_pad * 4 + 4 * 128 * 4
    cap = max(8, (vmem_budget_bytes - fixed) // per_row)
    if cap >= n_rows and max_tile_rows >= n_rows:
        return n_rows                                   # single full tile
    tn = min(max_tile_rows, cap, n_rows)
    return max(8, (tn // 8) * 8)


def order_loss_kernel(*refs, use_cosine_similarity):
    """Per-tile similarities: s1 = sim(zis, anchor), s2 = sim(zjs, anchor)."""
    if use_cosine_similarity:
        zis_ref, zjs_ref, anchor_ref, s1_ref, s2_ref = refs
        cov_inv_ref = None
    else:
        zis_ref, zjs_ref, anchor_ref, cov_inv_ref, s1_ref, s2_ref = refs

    zis = zis_ref[...].astype(jnp.float32)
    zjs = zjs_ref[...].astype(jnp.float32)
    za = anchor_ref[...].astype(jnp.float32)

    if use_cosine_similarity:
        # torch.nn.CosineSimilarity(dim=1, eps=1e-8):
        #   w12 * rsqrt(clamp_min(w1 * w2, eps^2))
        eps2 = jnp.float32(1e-16)
        wa = jnp.sum(za * za, axis=-1, keepdims=True)   # anchor norm^2, hoisted

        def sim(u):
            w12 = jnp.sum(u * za, axis=-1, keepdims=True)
            wu = jnp.sum(u * u, axis=-1, keepdims=True)
            return w12 * jax.lax.rsqrt(jnp.maximum(wu * wa, eps2))

        s1_ref[...] = sim(zis)
        s2_ref[...] = sim(zjs)
    else:
        # Mahalanobis distance per row: sqrt((u-v) @ cov_inv . (u-v)), two MXU
        # matmuls (no concat copy -> no extra vst pressure).
        cov_inv = cov_inv_ref[...].astype(jnp.float32)
        d1 = zis - za
        d2 = zjs - za
        t1 = jnp.dot(d1, cov_inv, preferred_element_type=jnp.float32)
        t2 = jnp.dot(d2, cov_inv, preferred_element_type=jnp.float32)
        q1 = jnp.sum(t1 * d1, axis=-1, keepdims=True)
        q2 = jnp.sum(t2 * d2, axis=-1, keepdims=True)
        s1_ref[...] = jnp.sqrt(q1)
        s2_ref[...] = jnp.sqrt(q2)
    # TODO(synk): the per-row sqrt/rsqrt above are still lane-sparse (8/1024); a
    # lane-dense relayout would shave the last EUP pushes for very small F.


def make_order_loss(dim, delta, use_cosine_similarity, loss_function,
                    additional_penalty=True, seed=0, max_tile_rows=2048):
    """Builds deterministic parameters; returns loss_fn(zis, zjs, z_anchor).

    loss_fn.reference is a pure-JAX implementation of the same forward pass.
    """
    key = jax.random.PRNGKey(seed)
    k_proj, k_cov = jax.random.split(key)
    # nn.Linear(dim, dim, bias=False): defined in the reference __init__ but never
    # used in forward(); instantiated only so parameter bookkeeping matches.
    bound = 1.0 / float(dim) ** 0.5
    _projector_w = jax.random.uniform(k_proj, (dim, dim), jnp.float32, -bound, bound)
    # nn.Parameter(torch.rand((dim, dim)))
    mahalanobis_cov = jax.random.uniform(k_cov, (dim, dim), jnp.float32, 0.0, 1.0)

    if use_cosine_similarity:
        cov_inv_const = None
    else:
        cov = mahalanobis_cov @ mahalanobis_cov.T + jnp.eye(dim, dtype=jnp.float32)
        # TODO(synk): matrix inverse has no Pallas primitive; computed ONCE here in
        # plain JAX (hoisted out of the per-step loss).
        cov_inv_const = jnp.linalg.inv(cov)

    bce = loss_function.lower() == "bce"
    two_phase = (not use_cosine_similarity) and bce     # global min/max normalization
    delta_f = jnp.float32(delta)
    max_tile_rows = max(8, int(max_tile_rows))
    tile_budget, vmem_limit = _vmem_budget_and_limit()

    def _pairwise_similarities(zis, zjs, z_anchor):
        n, feat = zis.shape
        assert feat == dim and zjs.shape == (n, feat) and z_anchor.shape == (n, feat)

        tn = _choose_tile_rows(n, feat, max_tile_rows, tile_budget,
                               maha=not use_cosine_similarity)
        num_tiles = (n + tn - 1) // tn                  # ragged last tile handled by Pallas

        row_spec = pl.BlockSpec((tn, feat), lambda i: (i, 0))
        in_specs = [row_spec, row_spec, row_spec]
        args = [zis, zjs, z_anchor]
        if not use_cosine_similarity:
            # Resident across the whole grid (constant index_map).
            in_specs.append(pl.BlockSpec((dim, dim), lambda i: (0, 0)))
            args.append(cov_inv_const)

        col_spec = pl.BlockSpec((tn, 1), lambda i: (i, 0))
        s1_col, s2_col = pl.pallas_call(
            functools.partial(order_loss_kernel,
                              use_cosine_similarity=use_cosine_similarity),
            out_shape=(jax.ShapeDtypeStruct((n, 1), jnp.float32),
                       jax.ShapeDtypeStruct((n, 1), jnp.float32)),
            grid_spec=pltpu.PrefetchScalarGridSpec(
                num_scalar_prefetch=0,
                grid=(num_tiles,),
                in_specs=in_specs,
                out_specs=(col_spec, col_spec),
            ),
            compiler_params=pltpu.CompilerParams(
                # No carried state -> batch tiles can be split across v7x's 2 TCs.
                dimension_semantics=("parallel",),
                vmem_limit_bytes=vmem_limit,
            ),
        )(*args)
        return s1_col[:, 0], s2_col[:, 0]

    def _loss_tail(s1, s2):
        # O(N) elementwise tail, lane-dense under XLA.
        diffs = jnp.maximum(s2 - s1 + delta_f, 0.0)
        if two_phase:
            diffs = diffs - jnp.min(diffs)
            # If every diff is identical this is 0/0 -> NaN, exactly like the
            # PyTorch reference (differences / differences.max()).
            diffs = diffs / jnp.max(diffs)
        diffs = jnp.clip(diffs, 0.0, 1.0)
        if bce:
            # nn.BCELoss(reduction='sum') vs zeros, with PyTorch's -100 log clamp.
            loss = jnp.sum(-jnp.maximum(jnp.log(1.0 - diffs), -100.0))
        else:
            # nn.MSELoss(reduction='sum') vs zeros.
            loss = jnp.sum(diffs * diffs)
        if additional_penalty:
            loss = loss + jnp.sum(-jnp.maximum(jnp.log(s1), -100.0))        # BCE(s1, 1)
            loss = loss + jnp.sum(-jnp.maximum(jnp.log(1.0 - s2), -100.0))  # BCE(s2, 0)
        return loss

    @jax.jit
    def _loss(zis, zjs, z_anchor):
        s1, s2 = _pairwise_similarities(zis, zjs, z_anchor)
        return _loss_tail(s1, s2)

    @jax.jit
    def _reference(zis, zjs, z_anchor):
        zis = zis.astype(jnp.float32)
        zjs = zjs.astype(jnp.float32)
        za = z_anchor.astype(jnp.float32)
        if use_cosine_similarity:
            def sim(u):
                num = jnp.sum(u * za, axis=-1)
                den = jnp.sum(u * u, axis=-1) * jnp.sum(za * za, axis=-1)
                return num / jnp.sqrt(jnp.maximum(den, jnp.float32(1e-16)))
        else:
            def sim(u):
                d = u - za
                return jnp.sqrt(jnp.einsum("ij,ij->i", d @ cov_inv_const, d))
        return _loss_tail(sim(zis), sim(zjs))

    def loss_fn(zis, zjs, z_anchor):
        return _loss(zis, zjs, z_anchor)

    loss_fn.reference = _reference
    return loss_fn


if __name__ == "__main__":
    F = 32
    key = jax.random.PRNGKey(0)
    k1, k2, k3 = jax.random.split(key, 3)
    # All-positive latents so cosine similarities lie in (0, 1] and the BCE penalty
    # terms (which require inputs in [0, 1], as in PyTorch) stay finite.
    zis24 = jnp.abs(jax.random.normal(k1, (24, F), jnp.float32)) + 0.1
    zjs24 = jnp.abs(jax.random.normal(k2, (24, F), jnp.float32)) + 0.1
    za24 = jnp.abs(jax.random.normal(k3, (24, F), jnp.float32)) + 0.1
    zis8, zjs8, za8 = zis24[:8], zjs24[:8], za24[:8]
    zis10, zjs10, za10 = zis24[:10], zjs24[:10], za24[:10]

    cases = []

    # 1) cosine + BCE + penalty, single full tile
    loss_cos = make_order_loss(dim=F, delta=0.5, use_cosine_similarity=True,
                               loss_function="bce", additional_penalty=True)
    cases.append(("cos_bce", loss_cos, (zis8, zjs8, za8)))

    # 2) same module, forced tiny tiles -> multi-tile + ragged last block (N=10, TN=8)
    loss_cos_tiled = make_order_loss(dim=F, delta=0.5, use_cosine_similarity=True,
                                     loss_function="bce", additional_penalty=True,
                                     max_tile_rows=8)
    cases.append(("cos_bce_ragged", loss_cos_tiled, (zis10, zjs10, za10)))

    # 3) Mahalanobis + MSE (two separate MXU matmuls path)
    loss_maha_mse = make_order_loss(dim=F, delta=0.5, use_cosine_similarity=False,
                                    loss_function="mse", additional_penalty=False)
    cases.append(("maha_mse", loss_maha_mse, (zis8, zjs8, za8)))

    # 4) Mahalanobis + BCE over 3 tiles: global min/max normalization in the XLA tail
    loss_maha_bce = make_order_loss(dim=F, delta=0.5, use_cosine_similarity=False,
                                    loss_function="bce", additional_penalty=False,
                                    max_tile_rows=8)
    cases.append(("maha_bce_tiled", loss_maha_bce, (zis24, zjs24, za24)))

    # 5) Mahalanobis + BCE with a ragged last block (N=10, TN=8)
    cases.append(("maha_bce_ragged", loss_maha_bce, (zis10, zjs10, za10)))

    for name, fn, args in cases:
        got = jax.block_until_ready(fn(*args))
        want = jax.block_until_ready(fn.reference(*args))
        assert jnp.isfinite(got), (name, got)
        assert jnp.isfinite(want), (name, want)
        assert jnp.allclose(got, want, rtol=2e-2, atol=1e-1), (name, got, want)

    print("KERNEL_OK")
</pallas_src>

<mosaic_0001>
module attributes {stable_mosaic.version = 11 : i64} {
  func.func @order_loss_kernel(%arg0: i32, %arg1: memref<8x32xf32, #tpu.memory_space<vmem>>, %arg2: memref<8x32xf32, #tpu.memory_space<vmem>>, %arg3: memref<8x32xf32, #tpu.memory_space<vmem>>, %arg4: memref<8x1xf32, #tpu.memory_space<vmem>>, %arg5: memref<8x1xf32, #tpu.memory_space<vmem>>) attributes {dimension_semantics = [#tpu.dimension_semantics<parallel>], iteration_bounds = array<i64: 1>, scalar_prefetch = 0 : i64, scratch_operands = 0 : i64, tpu.core_type = #tpu.core_type<tc>, window_params = [{transform_indices = @transform_0, window_bounds = array<i64: 8, 32>}, {transform_indices = @transform_1, window_bounds = array<i64: 8, 32>}, {transform_indices = @transform_2, window_bounds = array<i64: 8, 32>}, {transform_indices = @transform_3, window_bounds = array<i64: 8, 1>}, {transform_indices = @transform_4, window_bounds = array<i64: 8, 1>}]} {
    %c0 = arith.constant 0 : index
    %c0_0 = arith.constant 0 : index
    %0 = vector.load %arg1[%c0, %c0_0] : memref<8x32xf32, #tpu.memory_space<vmem>>, vector<8x32xf32>
    %c0_1 = arith.constant 0 : index
    %c0_2 = arith.constant 0 : index
    %1 = vector.load %arg2[%c0_1, %c0_2] : memref<8x32xf32, #tpu.memory_space<vmem>>, vector<8x32xf32>
    %c0_3 = arith.constant 0 : index
    %c0_4 = arith.constant 0 : index
    %2 = vector.load %arg3[%c0_3, %c0_4] : memref<8x32xf32, #tpu.memory_space<vmem>>, vector<8x32xf32>
    %3 = arith.mulf %2, %2 : vector<8x32xf32>
    %cst = arith.constant dense<0.000000e+00> : vector<8xf32>
    %4 = vector.multi_reduction <add>, %3, %cst [1] : vector<8x32xf32> to vector<8xf32>
    %5 = vector.shape_cast %4 : vector<8xf32> to vector<8x1xf32>
    %6 = arith.mulf %0, %2 : vector<8x32xf32>
    %cst_5 = arith.constant dense<0.000000e+00> : vector<8xf32>
    %7 = vector.multi_reduction <add>, %6, %cst_5 [1] : vector<8x32xf32> to vector<8xf32>
    %8 = vector.shape_cast %7 : vector<8xf32> to vector<8x1xf32>
    %9 = arith.mulf %0, %0 : vector<8x32xf32>
    %cst_6 = arith.constant dense<0.000000e+00> : vector<8xf32>
    %10 = vector.multi_reduction <add>, %9, %cst_6 [1] : vector<8x32xf32> to vector<8xf32>
    %11 = vector.shape_cast %10 : vector<8xf32> to vector<8x1xf32>
    %12 = arith.mulf %11, %5 : vector<8x1xf32>
    %cst_7 = arith.constant 1.000000e-16 : f32
    %13 = vector.broadcast %cst_7 : f32 to vector<8x1xf32>
    %14 = arith.maximumf %12, %13 : vector<8x1xf32>
    %15 = math.rsqrt %14 : vector<8x1xf32>
    %16 = arith.mulf %8, %15 : vector<8x1xf32>
    %c0_8 = arith.constant 0 : index
    %c0_9 = arith.constant 0 : index
    %17 = vector.load %arg4[%c0_8, %c0_9] : memref<8x1xf32, #tpu.memory_space<vmem>>, vector<8x1xf32>
    tpu.vector_store %arg4[%c0_8, %c0_9], %16 {strides = array<i32>} : memref<8x1xf32, #tpu.memory_space<vmem>>, vector<8x1xf32>,
    %18 = arith.mulf %1, %2 : vector<8x32xf32>
    %cst_10 = arith.constant dense<0.000000e+00> : vector<8xf32>
    %19 = vector.multi_reduction <add>, %18, %cst_10 [1] : vector<8x32xf32> to vector<8xf32>
    %20 = vector.shape_cast %19 : vector<8xf32> to vector<8x1xf32>
    %21 = arith.mulf %1, %1 : vector<8x32xf32>
    %cst_11 = arith.constant dense<0.000000e+00> : vector<8xf32>
    %22 = vector.multi_reduction <add>, %21, %cst_11 [1] : vector<8x32xf32> to vector<8xf32>
    %23 = vector.shape_cast %22 : vector<8xf32> to vector<8x1xf32>
    %24 = arith.mulf %23, %5 : vector<8x1xf32>
    %cst_12 = arith.constant 1.000000e-16 : f32
    %25 = vector.broadcast %cst_12 : f32 to vector<8x1xf32>
    %26 = arith.maximumf %24, %25 : vector<8x1xf32>
    %27 = math.rsqrt %26 : vector<8x1xf32>
    %28 = arith.mulf %20, %27 : vector<8x1xf32>
    %c0_13 = arith.constant 0 : index
    %c0_14 = arith.constant 0 : index
    %29 = vector.load %arg5[%c0_13, %c0_14] : memref<8x1xf32, #tpu.memory_space<vmem>>, vector<8x1xf32>
    tpu.vector_store %arg5[%c0_13, %c0_14], %28 {strides = array<i32>} : memref<8x1xf32, #tpu.memory_space<vmem>>, vector<8x1xf32>,
    return
  }
  func.func @transform_0(%arg0: i32) -> (i32, i32) {
    %c0_i32 = arith.constant 0 : i32
    %c0_i32_0 = arith.constant 0 : i32
    return %arg0, %c0_i32 : i32, i32
  }
  func.func @transform_1(%arg0: i32) -> (i32, i32) {
    %c0_i32 = arith.constant 0 : i32
    %c0_i32_0 = arith.constant 0 : i32
    return %arg0, %c0_i32 : i32, i32
  }
  func.func @transform_2(%arg0: i32) -> (i32, i32) {
    %c0_i32 = arith.constant 0 : i32
    %c0_i32_0 = arith.constant 0 : i32
    return %arg0, %c0_i32 : i32, i32
  }
  func.func @transform_3(%arg0: i32) -> (i32, i32) {
    %c0_i32 = arith.constant 0 : i32
    %c0_i32_0 = arith.constant 0 : i32
    return %arg0, %c0_i32 : i32, i32
  }
  func.func @transform_4(%arg0: i32) -> (i32, i32) {
    %c0_i32 = arith.constant 0 : i32
    %c0_i32_0 = arith.constant 0 : i32
    return %arg0, %c0_i32 : i32, i32
  }
}

</mosaic_0001>

<llo_original>
// kernel: _loss.1
$region0: #{_loss.1}
  #allocation0 [shape = 'u32[]', space=smem, size = 0x4, offset = 0x4, fixed_abs, tag = 'smem constant byte address 0x4 - core index']
  #allocation1 [shape = 'u32[72,128]{1,0:T(1,128)}', space=vmem, size = 0x9000, scoped, tag = 'internal scratch']
  %s0 = inlined_call_operand.hbm [shape: f32[8,32], index: 0, kind: input, shape index: {}]
  %s1 = inlined_call_operand.hbm [shape: f32[8,32], index: 1, kind: input, shape index: {}]
  %s2 = inlined_call_operand.hbm [shape: f32[8,32], index: 2, kind: input, shape index: {}]
  %s3 = inlined_call_operand.vmem [shape: f32[8,1], index: 3, kind: output, shape index: {0}]
  %s4 = inlined_call_operand.vmem [shape: f32[8,1], index: 4, kind: output, shape index: {1}]
  %5 = xla_tuple %s3, %s4
  %s6 = sld [smem:[#allocation0]]
  $region42: #{_loss.1} parent=0
    _
  %s8 = ssub.s32 1, %s6
  %s9 = scalar_select 0, %s8, %s6
  $region1: #{_loss.1} parent=0
    #allocation2 [shape = 'u8[4096]{0}', space=vmem, size = 0x1000, scoped, tag = 'input window, operand 0, single buffered']
    #allocation3 [shape = 's32[1]{0}', space=sflag, size = 0x4, scoped, tag = 'scoped memory for _loss.1']
    #allocation4 [shape = 'u8[4096]{0}', space=vmem, size = 0x1000, scoped, tag = 'input window, operand 1, single buffered']
    #allocation5 [shape = 's32[1]{0}', space=sflag, size = 0x4, scoped, tag = 'scoped memory for _loss.1']
    #allocation6 [shape = 'u8[4096]{0}', space=vmem, size = 0x1000, scoped, tag = 'input window, operand 2, single buffered']
    %10 = vsyncpa [#allocation3], 0
    %11 = vsyncpa [#allocation5], 0
    // Predicated region
    $region2: #{_loss.1} parent=1 // pred_check
      _
    $region3: #{_loss.1} parent=1 // pred_check_branch
      %13 = sbr.rel (0) target = $region5
    $region4: #{_loss.1} parent=1 // pred_region
      %15 = vsyncadd [#allocation3], 0
      %s17 = sshll.u32 %s0, 4
      %s18 = int_to_ptr.hbm [resolvable:$true] %s17
      %s19 = sshll.u32 [#allocation2], 4
      %s20 = int_to_ptr.vmem [resolvable:$true] %s19
      %22 = dma.hbm_to_vmem [thread:$0]  %s18, 128, %s20, [#allocation3]
    $region5: #{_loss.1} parent=1 // pred_fallthru
      _
    // Predicated region
    $region6: #{_loss.1} parent=1 // pred_check
      _
    $region7: #{_loss.1} parent=1 // pred_check_branch
      %24 = sbr.rel (0) target = $region9
    $region8: #{_loss.1} parent=1 // pred_region
      %26 = vsyncadd [#allocation5], 0
      %s28 = sshll.u32 %s1, 4
      %s29 = int_to_ptr.hbm [resolvable:$true] %s28
      %s30 = sshll.u32 [#allocation4], 4
      %s31 = int_to_ptr.vmem [resolvable:$true] %s30
      %33 = dma.hbm_to_vmem [thread:$0]  %s29, 128, %s31, [#allocation5]
    $region9: #{_loss.1} parent=1 // pred_fallthru
      _
    // Predicated region
    $region10: #{_loss.1} parent=1 // pred_check
      _
    $region11: #{_loss.1} parent=1 // pred_check_branch
      %35 = sbr.rel (0) target = $region13
    $region12: #{_loss.1} parent=1 // pred_region
      %37 = vsyncadd [#allocation5], 0
      %s39 = sshll.u32 %s2, 4
      %s40 = int_to_ptr.hbm [resolvable:$true] %s39
      %s41 = sshll.u32 [#allocation6], 4
      %s42 = int_to_ptr.vmem [resolvable:$true] %s41
      %44 = dma.hbm_to_vmem [thread:$0]  %s40, 128, %s42, [#allocation5]
    $region13: #{_loss.1} parent=1 // pred_fallthru
      _
    // Predicated region
    $region14: #{_loss.1} parent=1 // pred_check
      _
    $region15: #{_loss.1} parent=1 // pred_check_branch
      %46 = sbr.rel (0) target = $region17
    $region16: #{_loss.1} parent=1 // pred_region
      %48 = dma.done [#allocation3], 128
    $region17: #{_loss.1} parent=1 // pred_fallthru
      _
    // Predicated region
    $region18: #{_loss.1} parent=1 // pred_check
      _
    $region19: #{_loss.1} parent=1 // pred_check_branch
      %50 = sbr.rel (0) target = $region21
    $region20: #{_loss.1} parent=1 // pred_region
      %52 = dma.done [#allocation5], 128
    $region21: #{_loss.1} parent=1 // pred_fallthru
      _
    // Predicated region
    $region22: #{_loss.1} parent=1 // pred_check
      _
    $region23: #{_loss.1} parent=1 // pred_check_branch
      %54 = sbr.rel (0) target = $region25
    $region24: #{_loss.1} parent=1 // pred_region
      %56 = dma.done [#allocation5], 128
    $region25: #{_loss.1} parent=1 // pred_fallthru
      _
    %v57 = vld [vmem:[#allocation2] sm:$0xff]
    %v58 = vld [vmem:[#allocation4] sm:$0xff]
    %v59 = vld [vmem:[#allocation6] sm:$0xff]
    %v60 = vmul.f32 %v59, %v59
    %vm61 = vcmask 261120
    %v62 = vsel %vm61, %v60, 0.0
    %63 = vadd.xlane.f32.xlu0 %v62
    %v64 = vpop.xlane.xlu0 %63
    %v65 = vmul.f32 %v57, %v59
    %v66 = vsel %vm61, %v65, 0.0
    %67 = vadd.xlane.f32.xlu0 %v66
    %v68 = vpop.xlane.xlu0 %67
    %v69 = vmul.f32 %v57, %v57
    %v70 = vsel %vm61, %v69, 0.0
    %71 = vadd.xlane.f32.xlu0 %v70
    %v72 = vpop.xlane.xlu0 %71
    %v73 = vmul.f32 %v72, %v64
    %v74 = vmax.f32 %v73, 1e-16
    %v75 = vrsqrt.pop %v74
    %v76 = vmul.f32 %v75, %v74
    %v77 = vmul.f32 %v76, %v75
    %v78 = vmul.f32 0.5, %v77
    %v79 = vsub.f32 1.5, %v78
    %v80 = vmul.f32 %v75, %v79
    %vm81 = vweird.f32 %v74
    %vm82 = vweird.f32 %v75
    %vm83 = vmor %vm81, %vm82
    %v84 = vsel %vm83, %v75, %v80
    %v85 = vmul.f32 %v68, %v84
    %vm86 = vcmask 7168
    %87 = vst.msk [vmem:[%s3] sm:$0xff] %vm86, %v85
    %v88 = vmul.f32 %v58, %v59
    %v89 = vsel %vm61, %v88, 0.0
    %90 = vadd.xlane.f32.xlu0 %v89
    %v91 = vpop.xlane.xlu0 %90
    %v92 = vmul.f32 %v58, %v58
    %v93 = vsel %vm61, %v92, 0.0
    %94 = vadd.xlane.f32.xlu0 %v93
    %v95 = vpop.xlane.xlu0 %94
    %v96 = vmul.f32 %v95, %v64
    %v97 = vmax.f32 %v96, 1e-16
    %v98 = vrsqrt.pop %v97
    %v99 = vmul.f32 %v98, %v97
    %v100 = vmul.f32 %v99, %v98
    %v101 = vmul.f32 0.5, %v100
    %v102 = vsub.f32 1.5, %v101
    %v103 = vmul.f32 %v98, %v102
    %vm104 = vweird.f32 %v97
    %vm105 = vweird.f32 %v98
    %vm106 = vmor %vm104, %vm105
    %v107 = vsel %vm106, %v98, %v103
    %v108 = vmul.f32 %v91, %v107
    %109 = vst.msk [vmem:[%s4] sm:$0xff] %vm86, %v108
    // Predicated region
    $region26: #{_loss.1} parent=1 // pred_check
      _
    $region27: #{_loss.1} parent=1 // pred_check_branch
      %111 = sbr.rel (0) target = $region29
    $region28: #{_loss.1} parent=1 // pred_region
      _
    $region29: #{_loss.1} parent=1 // pred_fallthru
      _
    // Predicated region
    $region30: #{_loss.1} parent=1 // pred_check
      _
    $region31: #{_loss.1} parent=1 // pred_check_branch
      %113 = sbr.rel (0) target = $region33
    $region32: #{_loss.1} parent=1 // pred_region
      _
    $region33: #{_loss.1} parent=1 // pred_fallthru
      _
    // Predicated region
    $region34: #{_loss.1} parent=1 // pred_check
      _
    $region35: #{_loss.1} parent=1 // pred_check_branch
      %115 = sbr.rel (0) target = $region37
    $region36: #{_loss.1} parent=1 // pred_region
      _
    $region37: #{_loss.1} parent=1 // pred_fallthru
      _
    // Predicated region
    $region38: #{_loss.1} parent=1 // pred_check
      _
    $region39: #{_loss.1} parent=1 // pred_check_branch
      %117 = sbr.rel (0) target = $region41
    $region40: #{_loss.1} parent=1 // pred_region
      _
    $region41: #{_loss.1} parent=1 // pred_fallthru
      _
    %118 = vsyncpa [#allocation3], 1
    %119 = vsyncpa [#allocation5], 1

</llo_original>
